<compile_context>
chip_gen: v6e
topology: v6e:2x2x1
jax: 0.10.0
libtpu: 0.0.40
codegen_flags: <defaults>
</compile_context>

<pallas_src>
import functools

import jax
import jax.numpy as jnp
from jax.experimental import pallas as pl
from jax.experimental.pallas import tpu as pltpu


# ----------------------------------------------------------------------------
# Kernels
# ----------------------------------------------------------------------------

def ffm_feat_kernel(x_ref, w_ref, bias_ref, feat_ref, sum_ref, *, hw, thw):
    """Pass 1: feat = relu(W_folded @ x + bias), plus per-channel spatial sums."""
    t = pl.program_id(1)
    # In-kernel cast: x tile is f32 in VMEM, bf16 only for the MXU operands.
    x_bf16 = x_ref[...].astype(jnp.bfloat16)                      # (Cin, thw)
    f = jnp.dot(w_ref[...], x_bf16, preferred_element_type=jnp.float32)
    f = jnp.maximum(f + bias_ref[...], 0.0)                       # (Cout, thw) f32
    feat_ref[...] = f.astype(feat_ref.dtype)

    @pl.when(t == 0)
    def _init():
        sum_ref[...] = jnp.zeros_like(sum_ref)

    if hw % thw != 0:
        # cdiv grid: mask the padded lanes of the last tile so the pooled mean
        # over HW stays exact.
        lane = jax.lax.broadcasted_iota(jnp.int32, f.shape, dimension=1)
        f = jnp.where(t * thw + lane < hw, f, 0.0)

    sum_ref[...] += jnp.sum(f, axis=1, keepdims=True)             # (Cout, 1) f32


def ffm_scale_kernel(att_ref, feat_ref, o_ref):
    """Pass 2: out = feat * (att + 1).  att_ref holds (att + 1) per channel."""
    # bf16 rescale: (Cout, 1) broadcasts over the HW lanes; no f32 upcast of
    # the whole tile (Mosaic handles bf16 arithmetic on every generation).
    o_ref[...] = feat_ref[...] * att_ref[...].astype(feat_ref.dtype)


# ----------------------------------------------------------------------------
# Tiling / VMEM sizing helpers
# ----------------------------------------------------------------------------

def _round_up(v, m):
    return -(-v // m) * m


def _vmem_limit_bytes():
    """Scoped VMEM limit with headroom under the physical capacity."""
    cap = 64 * 1024 * 1024  # conservative fallback (v7x physical VMEM)
    try:
        cap = int(pltpu.get_tpu_info().vmem_capacity_bytes)
    except Exception:
        pass
    return int(min(cap * 3 // 4, 96 * 1024 * 1024))


def _auto_hw_tile(hw, cin, cout, budget_bytes):
    """Largest 128-multiple lane tile whose double-buffered footprint fits."""
    hw_pad = _round_up(hw, 128)
    # pass 1 per lane: f32 x (double-buffered) + bf16 feat out (double-buffered)
    #                  + f32 dot result scratch
    p1 = 2 * 4 * cin + 2 * 2 * cout + 4 * cout
    # pass 2 per lane: bf16 feat in + bf16 out, both double-buffered
    p2 = 2 * 2 * cout + 2 * 2 * cout
    per_lane = max(p1, p2)
    max_thw = max(128, (budget_bytes // per_lane) // 128 * 128)
    return min(hw_pad, max_thw)


# ----------------------------------------------------------------------------
# Wrapper
# ----------------------------------------------------------------------------

@functools.partial(jax.jit, static_argnames=("thw", "vmem_limit"))
def _ffm_impl(x_nchw, params, *, thw, vmem_limit):
    wt, scale, bias, w1t, b1, w2t, b2 = params
    N, Cin, H, W = x_nchw.shape
    Cout = wt.shape[0]
    HW = H * W
    n_tiles = -(-HW // thw)                       # cdiv grid (masked tail)

    x = x_nchw.reshape(N, Cin, HW)                # free view; stays f32 in HBM
    # Fold BN scale into the conv weight (tiny one-time op, f32 then bf16).
    w_folded = (wt * scale).astype(jnp.bfloat16)  # (Cout, Cin)

    # ---- pass 1: feat tiles + per-channel spatial sums ---------------------
    feat, sums = pl.pallas_call(
        functools.partial(ffm_feat_kernel, hw=HW, thw=thw),
        out_shape=(
            jax.ShapeDtypeStruct((N, Cout, HW), jnp.bfloat16),
            jax.ShapeDtypeStruct((N, Cout, 1), jnp.float32),
        ),
        grid_spec=pltpu.PrefetchScalarGridSpec(
            num_scalar_prefetch=0,
            grid=(N, n_tiles),
            in_specs=[
                pl.BlockSpec((None, Cin, thw), lambda n, t: (n, 0, t)),   # x (f32)
                pl.BlockSpec((Cout, Cin), lambda n, t: (0, 0)),           # conv W^T * scale
                pl.BlockSpec((Cout, 1), lambda n, t: (0, 0)),             # BN bias
            ],
            out_specs=[
                pl.BlockSpec((None, Cout, thw), lambda n, t: (n, 0, t)),  # feat
                pl.BlockSpec((None, Cout, 1), lambda n, t: (n, 0, 0)),    # sums (resident over t)
            ],
        ),
        compiler_params=pltpu.CompilerParams(
            dimension_semantics=("parallel", "arbitrary"),
            vmem_limit_bytes=vmem_limit),
    )(x, w_folded, bias)

    # ---- hoisted SE MLP: once per image, tiny (N, Cout) math in plain JAX --
    pooled = sums[:, :, 0] * (1.0 / HW)                            # (N, Cout) f32
    h = jnp.maximum(pooled @ w1t.T + b1[:, 0], 0.0)                # (N, mid)
    att = jax.nn.sigmoid(h @ w2t.T + b2[:, 0])                     # (N, Cout)
    att_p1 = (att + 1.0)[:, :, None]                               # (N, Cout, 1) f32

    # ---- pass 2: streaming rescale of feat, in place ------------------------
    out = pl.pallas_call(
        ffm_scale_kernel,
        out_shape=jax.ShapeDtypeStruct((N, Cout, HW), jnp.bfloat16),
        grid_spec=pltpu.PrefetchScalarGridSpec(
            num_scalar_prefetch=0,
            grid=(N, n_tiles),
            in_specs=[
                pl.BlockSpec((None, Cout, 1), lambda n, t: (n, 0, 0)),    # att + 1
                pl.BlockSpec((None, Cout, thw), lambda n, t: (n, 0, t)),  # feat
            ],
            out_specs=pl.BlockSpec((None, Cout, thw), lambda n, t: (n, 0, t)),
        ),
        # NOTE: index 1 == feat; shifts if scalar-prefetch args are ever added.
        input_output_aliases={1: 0},
        compiler_params=pltpu.CompilerParams(
            dimension_semantics=("parallel", "parallel"),
            vmem_limit_bytes=vmem_limit),
    )(att_p1, feat)

    return out.reshape(N, Cout, H, W)             # free view back to NCHW


def feature_fusion_module(x_nchw, params, *, hw_tile=None):
    """x_nchw: (N, Cin, H, W) float32. Returns (N, Cout, H, W) bfloat16."""
    N, Cin, H, W = x_nchw.shape
    Cout = params[0].shape[0]
    HW = H * W
    vmem_limit = _vmem_limit_bytes()
    if hw_tile is None:
        hw_tile = _auto_hw_tile(HW, Cin, Cout, vmem_limit // 2)
    thw = max(128, (hw_tile // 128) * 128)
    thw = min(thw, _round_up(HW, 128))
    return _ffm_impl(x_nchw, params, thw=thw, vmem_limit=vmem_limit)


# ----------------------------------------------------------------------------
# Parameters / reference
# ----------------------------------------------------------------------------

def make_params(key, in_chan, out_chan):
    """Deterministic synthetic parameters, stored channels-first (transposed)."""
    ks = jax.random.split(key, 8)
    mid = out_chan // 4
    # ConvBNReLU(in_chan, out_chan, ks=1): conv weight transposed to (Cout, Cin).
    wt = jax.random.normal(ks[0], (out_chan, in_chan), jnp.float32) * 0.1
    # BatchNorm2d (eval mode), folded: scale = g/sqrt(v+eps), bias = b - m*scale.
    gamma = 1.0 + 0.1 * jax.random.normal(ks[1], (out_chan,), jnp.float32)
    beta = 0.1 * jax.random.normal(ks[2], (out_chan,), jnp.float32)
    rmean = 0.1 * jax.random.normal(ks[3], (out_chan,), jnp.float32)
    rvar = jnp.abs(1.0 + 0.1 * jax.random.normal(ks[4], (out_chan,), jnp.float32))
    scale = gamma / jnp.sqrt(rvar + 1e-5)
    bias = beta - rmean * scale
    # Attention 1x1 convs (with bias), also transposed for channels-first math.
    w1t = jax.random.normal(ks[5], (mid, out_chan), jnp.float32) * 0.1
    b1 = 0.1 * jax.random.normal(ks[6], (mid,), jnp.float32)
    w2t = jax.random.normal(ks[7], (out_chan, mid), jnp.float32) * 0.1
    b2 = jnp.zeros((out_chan,), jnp.float32)
    return (wt, scale.reshape(out_chan, 1), bias.reshape(out_chan, 1),
            w1t, b1.reshape(mid, 1), w2t, b2.reshape(out_chan, 1))


def reference(x_nchw, params):
    """Pure-JAX f32 reference of the PyTorch forward (eval mode)."""
    wt, scale, bias, w1t, b1, w2t, b2 = params
    N, Cin, H, W = x_nchw.shape
    Cout = wt.shape[0]
    x = x_nchw.reshape(N, Cin, H * W)
    feat = jnp.maximum(jnp.einsum('oc,ncs->nos', wt, x) * scale + bias, 0.0)
    pooled = jnp.mean(feat, axis=2, keepdims=True)            # (N, Cout, 1)
    h = jnp.maximum(jnp.einsum('mo,nos->nms', w1t, pooled) + b1, 0.0)
    att = jax.nn.sigmoid(jnp.einsum('om,nms->nos', w2t, h) + b2)
    out = feat * att + feat
    return out.reshape(N, Cout, H, W)


# ----------------------------------------------------------------------------
# Self-test
# ----------------------------------------------------------------------------

if __name__ == "__main__":
    key = jax.random.PRNGKey(0)
    kx, kp, kx2 = jax.random.split(key, 3)

    N, Cin, H, W = 2, 8, 16, 16
    Cout = 16
    x = jax.random.normal(kx, (N, Cin, H, W), jnp.float32)
    params = make_params(kp, Cin, Cout)

    # hw_tile=128 -> two 128-wide spatial tiles per image, exercising the
    # accumulate-then-rescale structure and the resident sums block.
    out = feature_fusion_module(x, params, hw_tile=128)
    out = jax.block_until_ready(out)
    ref = reference(x, params)
    assert out.shape == (N, Cout, H, W)
    err = float(jnp.max(jnp.abs(out.astype(jnp.float32) - ref)))
    # bf16 activations/weights on the heavy path -> loosened tolerance.
    assert jnp.allclose(out.astype(jnp.float32), ref, atol=5e-2, rtol=5e-2), err

    # Second shape: H*W = 100 (not a multiple of 128) exercises the cdiv grid
    # with masked-tail accumulation; hw_tile left to the auto VMEM-aware pick.
    x2 = jax.random.normal(kx2, (1, Cin, 10, 10), jnp.float32)
    out2 = jax.block_until_ready(feature_fusion_module(x2, params))
    ref2 = reference(x2, params)
    err2 = float(jnp.max(jnp.abs(out2.astype(jnp.float32) - ref2)))
    assert jnp.allclose(out2.astype(jnp.float32), ref2, atol=5e-2, rtol=5e-2), err2

    print("KERNEL_OK")
</pallas_src>

<mosaic_0001>
module attributes {stable_mosaic.version = 11 : i64} {
  func.func @ffm_scale_kernel(%arg0: i32, %arg1: i32, %arg2: memref<1x16x1xf32, #tpu.memory_space<vmem>>, %arg3: memref<1x16x128xbf16, #tpu.memory_space<vmem>>, %arg4: memref<1x16x128xbf16, #tpu.memory_space<vmem>>) attributes {dimension_semantics = [#tpu.dimension_semantics<parallel>, #tpu.dimension_semantics<parallel>], iteration_bounds = array<i64: 2, 2>, scalar_prefetch = 0 : i64, scratch_operands = 0 : i64, tpu.core_type = #tpu.core_type<tc>, window_params = [{transform_indices = @transform_0, window_bounds = array<i64: 1, 16, 1>}, {transform_indices = @transform_1, window_bounds = array<i64: 1, 16, 128>}, {transform_indices = @transform_2, window_bounds = array<i64: 1, 16, 128>}]} {
    %c0 = arith.constant 0 : index
    %c0_0 = arith.constant 0 : index
    %c0_1 = arith.constant 0 : index
    %0 = vector.load %arg3[%c0, %c0_0, %c0_1] : memref<1x16x128xbf16, #tpu.memory_space<vmem>>, vector<1x16x128xbf16>
    %1 = vector.shape_cast %0 : vector<1x16x128xbf16> to vector<16x128xbf16>
    %c0_2 = arith.constant 0 : index
    %c0_3 = arith.constant 0 : index
    %c0_4 = arith.constant 0 : index
    %2 = vector.load %arg2[%c0_2, %c0_3, %c0_4] : memref<1x16x1xf32, #tpu.memory_space<vmem>>, vector<1x16x1xf32>
    %3 = vector.shape_cast %2 : vector<1x16x1xf32> to vector<16x1xf32>
    %4 = arith.truncf %3 : vector<16x1xf32> to vector<16x1xbf16>
    %5 = vector.broadcast %4 : vector<16x1xbf16> to vector<16x128xbf16>
    %6 = arith.mulf %1, %5 : vector<16x128xbf16>
    %c0_5 = arith.constant 0 : index
    %c0_6 = arith.constant 0 : index
    %c0_7 = arith.constant 0 : index
    %7 = vector.load %arg4[%c0_5, %c0_6, %c0_7] : memref<1x16x128xbf16, #tpu.memory_space<vmem>>, vector<1x16x128xbf16>
    %8 = vector.shape_cast %7 : vector<1x16x128xbf16> to vector<16x128xbf16>
    %9 = vector.shape_cast %6 : vector<16x128xbf16> to vector<1x16x128xbf16>
    tpu.vector_store %arg4[%c0_5, %c0_6, %c0_7], %9 {strides = array<i32>} : memref<1x16x128xbf16, #tpu.memory_space<vmem>>, vector<1x16x128xbf16>,
    return
  }
  func.func @transform_0(%arg0: i32, %arg1: i32) -> (i32, i32, i32) {
    %c0_i32 = arith.constant 0 : i32
    %c0_i32_0 = arith.constant 0 : i32
    %c0_i32_1 = arith.constant 0 : i32
    return %arg0, %c0_i32, %c0_i32_0 : i32, i32, i32
  }
  func.func @transform_1(%arg0: i32, %arg1: i32) -> (i32, i32, i32) {
    %c0_i32 = arith.constant 0 : i32
    %c0_i32_0 = arith.constant 0 : i32
    return %arg0, %c0_i32, %arg1 : i32, i32, i32
  }
  func.func @transform_2(%arg0: i32, %arg1: i32) -> (i32, i32, i32) {
    %c0_i32 = arith.constant 0 : i32
    %c0_i32_0 = arith.constant 0 : i32
    return %arg0, %c0_i32, %arg1 : i32, i32, i32
  }
}

module attributes {stable_mosaic.version = 11 : i64} {
  func.func @ffm_feat_kernel(%arg0: i32, %arg1: i32, %arg2: memref<1x8x128xf32, #tpu.memory_space<vmem>>, %arg3: memref<16x8xbf16, #tpu.memory_space<vmem>>, %arg4: memref<16x1xf32, #tpu.memory_space<vmem>>, %arg5: memref<1x16x128xbf16, #tpu.memory_space<vmem>>, %arg6: memref<1x16x1xf32, #tpu.memory_space<vmem>>) attributes {dimension_semantics = [#tpu.dimension_semantics<parallel>, #tpu.dimension_semantics<arbitrary>], iteration_bounds = array<i64: 2, 2>, scalar_prefetch = 0 : i64, scratch_operands = 0 : i64, tpu.core_type = #tpu.core_type<tc>, window_params = [{transform_indices = @transform_0, window_bounds = array<i64: 1, 8, 128>}, {pipeline_mode = #tpu.pipeline_mode<synchronous>, transform_indices = @transform_1, window_bounds = array<i64: 16, 8>}, {pipeline_mode = #tpu.pipeline_mode<synchronous>, transform_indices = @transform_2, window_bounds = array<i64: 16, 1>}, {transform_indices = @transform_3, window_bounds = array<i64: 1, 16, 128>}, {transform_indices = @transform_4, window_bounds = array<i64: 1, 16, 1>}]} {
    %c0 = arith.constant 0 : index
    %c0_0 = arith.constant 0 : index
    %c0_1 = arith.constant 0 : index
    %0 = vector.load %arg2[%c0, %c0_0, %c0_1] : memref<1x8x128xf32, #tpu.memory_space<vmem>>, vector<1x8x128xf32>
    %1 = vector.shape_cast %0 : vector<1x8x128xf32> to vector<8x128xf32>
    %2 = arith.truncf %1 : vector<8x128xf32> to vector<8x128xbf16>
    %c0_2 = arith.constant 0 : index
    %c0_3 = arith.constant 0 : index
    %3 = vector.load %arg3[%c0_2, %c0_3] : memref<16x8xbf16, #tpu.memory_space<vmem>>, vector<16x8xbf16>
    %cst = arith.constant dense<0.000000e+00> : vector<16x128xf32>
    %4 = tpu.matmul %3, %2, %cst {dimension_numbers = #tpu.dot_dimension_numbers<[1], [0], [0], [1], [0, 0, 1, 1], [], []>} : vector<16x8xbf16>, vector<8x128xbf16>, vector<16x128xf32> -> vector<16x128xf32>
    %c0_4 = arith.constant 0 : index
    %c0_5 = arith.constant 0 : index
    %5 = vector.load %arg4[%c0_4, %c0_5] : memref<16x1xf32, #tpu.memory_space<vmem>>, vector<16x1xf32>
    %6 = vector.broadcast %5 : vector<16x1xf32> to vector<16x128xf32>
    %7 = arith.addf %4, %6 : vector<16x128xf32>
    %cst_6 = arith.constant 0.000000e+00 : f32
    %8 = vector.broadcast %cst_6 : f32 to vector<16x128xf32>
    %9 = arith.maximumf %7, %8 : vector<16x128xf32>
    %10 = arith.truncf %9 : vector<16x128xf32> to vector<16x128xbf16>
    %c0_7 = arith.constant 0 : index
    %c0_8 = arith.constant 0 : index
    %c0_9 = arith.constant 0 : index
    %11 = vector.load %arg5[%c0_7, %c0_8, %c0_9] : memref<1x16x128xbf16, #tpu.memory_space<vmem>>, vector<1x16x128xbf16>
    %12 = vector.shape_cast %11 : vector<1x16x128xbf16> to vector<16x128xbf16>
    %13 = vector.shape_cast %10 : vector<16x128xbf16> to vector<1x16x128xbf16>
    tpu.vector_store %arg5[%c0_7, %c0_8, %c0_9], %13 {strides = array<i32>} : memref<1x16x128xbf16, #tpu.memory_space<vmem>>, vector<1x16x128xbf16>,
    %c0_i32 = arith.constant 0 : i32
    %14 = arith.cmpi eq, %arg1, %c0_i32 : i32
    %15 = arith.extui %14 : i1 to i32
    %c0_i32_10 = arith.constant 0 : i32
    %16 = arith.cmpi ne, %15, %c0_i32_10 : i32
    scf.if %16 {
      %cst_18 = arith.constant 0.000000e+00 : f32
      %25 = vector.broadcast %cst_18 : f32 to vector<16x1xf32>
      %c0_19 = arith.constant 0 : index
      %c0_20 = arith.constant 0 : index
      %c0_21 = arith.constant 0 : index
      %26 = vector.load %arg6[%c0_19, %c0_20, %c0_21] : memref<1x16x1xf32, #tpu.memory_space<vmem>>, vector<1x16x1xf32>
      %27 = vector.shape_cast %26 : vector<1x16x1xf32> to vector<16x1xf32>
      %28 = vector.shape_cast %25 : vector<16x1xf32> to vector<1x16x1xf32>
      tpu.vector_store %arg6[%c0_19, %c0_20, %c0_21], %28 {strides = array<i32>} : memref<1x16x1xf32, #tpu.memory_space<vmem>>, vector<1x16x1xf32>,
    } else {
    }
    %c0_11 = arith.constant 0 : index
    %c0_12 = arith.constant 0 : index
    %c0_13 = arith.constant 0 : index
    %17 = vector.load %arg6[%c0_11, %c0_12, %c0_13] : memref<1x16x1xf32, #tpu.memory_space<vmem>>, vector<1x16x1xf32>
    %18 = vector.shape_cast %17 : vector<1x16x1xf32> to vector<16x1xf32>
    %cst_14 = arith.constant dense<0.000000e+00> : vector<16xf32>
    %19 = vector.multi_reduction <add>, %9, %cst_14 [1] : vector<16x128xf32> to vector<16xf32>
    %20 = vector.shape_cast %19 : vector<16xf32> to vector<16x1xf32>
    %21 = arith.addf %18, %20 : vector<16x1xf32>
    %c0_15 = arith.constant 0 : index
    %c0_16 = arith.constant 0 : index
    %c0_17 = arith.constant 0 : index
    %22 = vector.load %arg6[%c0_15, %c0_16, %c0_17] : memref<1x16x1xf32, #tpu.memory_space<vmem>>, vector<1x16x1xf32>
    %23 = vector.shape_cast %22 : vector<1x16x1xf32> to vector<16x1xf32>
    %24 = vector.shape_cast %21 : vector<16x1xf32> to vector<1x16x1xf32>
    tpu.vector_store %arg6[%c0_15, %c0_16, %c0_17], %24 {strides = array<i32>} : memref<1x16x1xf32, #tpu.memory_space<vmem>>, vector<1x16x1xf32>,
    return
  }
  func.func @transform_0(%arg0: i32, %arg1: i32) -> (i32, i32, i32) {
    %c0_i32 = arith.constant 0 : i32
    %c0_i32_0 = arith.constant 0 : i32
    return %arg0, %c0_i32, %arg1 : i32, i32, i32
  }
  func.func @transform_1(%arg0: i32, %arg1: i32) -> (i32, i32) {
    %c0_i32 = arith.constant 0 : i32
    %c0_i32_0 = arith.constant 0 : i32
    %c0_i32_1 = arith.constant 0 : i32
    return %c0_i32, %c0_i32_0 : i32, i32
  }
  func.func @transform_2(%arg0: i32, %arg1: i32) -> (i32, i32) {
    %c0_i32 = arith.constant 0 : i32
    %c0_i32_0 = arith.constant 0 : i32
    %c0_i32_1 = arith.constant 0 : i32
    return %c0_i32, %c0_i32_0 : i32, i32
  }
  func.func @transform_3(%arg0: i32, %arg1: i32) -> (i32, i32, i32) {
    %c0_i32 = arith.constant 0 : i32
    %c0_i32_0 = arith.constant 0 : i32
    return %arg0, %c0_i32, %arg1 : i32, i32, i32
  }
  func.func @transform_4(%arg0: i32, %arg1: i32) -> (i32, i32, i32) {
    %c0_i32 = arith.constant 0 : i32
    %c0_i32_0 = arith.constant 0 : i32
    %c0_i32_1 = arith.constant 0 : i32
    return %arg0, %c0_i32, %c0_i32_0 : i32, i32, i32
  }
}

</mosaic_0001>

<llo_original>
// kernel: _ffm_impl.3
$region0: #{_ffm_impl.3}
  #allocation0 [shape = 'u32[]', space=smem, size = 0x4, offset = 0x4, fixed_abs, tag = 'smem constant byte address 0x4 - core index']
  #allocation1 [shape = 'u32[144,128]{1,0:T(1,128)}', space=vmem, size = 0x12000, scoped, tag = 'internal scratch']
  %s0 = inlined_call_operand.vmem [shape: f32[2,16,1], index: 0, kind: input, shape index: {}]
  %s1 = inlined_call_operand.vmem [shape: bf16[2,16,256], index: 1, kind: input, shape index: {}, may-alias: {1,2}]
  %s2 = inlined_call_operand.vmem [shape: bf16[2,16,256], index: 2, kind: output, shape index: {}, may-alias: {1,2}]
  %s3 = sld [smem:[#allocation0]]
  $region119: #{_ffm_impl.3} parent=0
    _
  %s5 = ssub.s32 1, %s3
  %s6 = scalar_select 0, %s5, %s3
  $region1: #{_ffm_impl.3} parent=0
    #allocation2 [shape = 'u8[8192]{0}', space=vmem, size = 0x2000, scoped, tag = 'input window, operand 1']
    #allocation3 [shape = 'u8[8192]{0}', space=vmem, size = 0x2000, scoped, tag = 'output window, operand 0']
    loop: start=0, step=1, limit=6
    $region2: #{_ffm_impl.3} parent=1 // loop_pre_header
      _
    $region3: #{_ffm_impl.3} parent=1 // loop_header
      %s8 = sphi 0, %s12
      %p9 = scmp.ge.s32.totalorder %s8, 6
      %s15 = sphi 0, %s27
      %s16 = sphi 0, %s23
      %s17 = sphi 0, %s15
      %s18 = sphi 0, %s16
      %s19 = sphi 0, %s17
      %s20 = sphi 0, %s18
      %s30 = sphi 0, %s32
      %s33 = sphi 0, %s30
      %s34 = sphi 0, %s33
      %s50 = sphi 0, %s34
      %s58 = sphi 0, %s60
      %s61 = sphi 0, %s58
      %s62 = sphi 0, %s61
      %s78 = sphi 0, %s62
      %s86 = sphi 0, %s88
      %s89 = sphi 0, %s86
      %s90 = sphi 0, %s89
      %s106 = sphi 0, %s90
    $region4: #{_ffm_impl.3} parent=1 // loop_header_branch
      %11 = sbr.rel (%p9) target = $region8
    $region5: #{_ffm_impl.3} parent=1 // loop_body
      %s13 = ssub.s32 %s8, 1
      %s14 = ssub.s32 %s8, 2
      %s21 = sadd.s32 1, %s16
      %p22 = scmp.ge.s32.totalorder %s21, 2
      %s23 = scalar_select %p22, 0, %s21
      %s24 = sadd.s32 1, %s15
      %s25 = scalar_select %p22, %s24, %s15
      %p26 = scmp.ge.s32.totalorder %s25, 2
      %s27 = scalar_select %p26, 0, %s25
      %s28 = ssub.s32 %s15, %s27
      %p29 = scmp.eq.s32.totalorder %s28, 0
      %s31 = sadd.s32 %s30, 1
      %s32 = scalar_select %p29, %s30, %s31
      %p35 = pneg %p29
      %p36 = scmp.eq.s32.totalorder %s8, 3
      %p37 = por %p35, %p36
      %p38 = scmp.ne.s32.totalorder %s30, %s33
      %p39 = scmp.eq.s32.totalorder %s8, 0
      %p40 = por %p38, %p39
      %p41 = scmp.ne.s32.totalorder %s30, %s33
      %p42 = scmp.eq.s32.totalorder %s13, 3
      %p43 = por %p41, %p42
      %p44 = scmp.ne.s32.totalorder %s33, %s34
      %p45 = scmp.eq.s32.totalorder %s13, 0
      %p46 = por %p44, %p45
      %p47 = scmp.ne.s32.totalorder %s33, %s34
      %p48 = scmp.eq.s32.totalorder %s14, 3
      %p49 = por %p47, %p48
      %p51 = scmp.ne.s32.totalorder %s34, %s50
      %p52 = scmp.eq.s32.totalorder %s14, 0
      %p53 = por %p51, %p52
      %s54 = ssub.s32 %s15, %s27
      %s55 = ssub.s32 %s16, %s23
      %s56 = sor.u32 %s54, %s55
      %p57 = scmp.eq.s32.totalorder %s56, 0
      %s59 = sadd.s32 %s58, 1
      %s60 = scalar_select %p57, %s58, %s59
      %p63 = pneg %p57
      %p64 = scmp.eq.s32.totalorder %s8, 3
      %p65 = por %p63, %p64
      %p66 = scmp.ne.s32.totalorder %s58, %s61
      %p67 = scmp.eq.s32.totalorder %s8, 0
      %p68 = por %p66, %p67
      %p69 = scmp.ne.s32.totalorder %s58, %s61
      %p70 = scmp.eq.s32.totalorder %s13, 3
      %p71 = por %p69, %p70
      %p72 = scmp.ne.s32.totalorder %s61, %s62
      %p73 = scmp.eq.s32.totalorder %s13, 0
      %p74 = por %p72, %p73
      %p75 = scmp.ne.s32.totalorder %s61, %s62
      %p76 = scmp.eq.s32.totalorder %s14, 3
      %p77 = por %p75, %p76
      %p79 = scmp.ne.s32.totalorder %s62, %s78
      %p80 = scmp.eq.s32.totalorder %s14, 0
      %p81 = por %p79, %p80
      %s82 = ssub.s32 %s15, %s27
      %s83 = ssub.s32 %s16, %s23
      %s84 = sor.u32 %s82, %s83
      %p85 = scmp.eq.s32.totalorder %s84, 0
      %s87 = sadd.s32 %s86, 1
      %s88 = scalar_select %p85, %s86, %s87
      %p91 = pneg %p85
      %p92 = scmp.eq.s32.totalorder %s8, 3
      %p93 = por %p91, %p92
      %p94 = scmp.ne.s32.totalorder %s86, %s89
      %p95 = scmp.eq.s32.totalorder %s8, 0
      %p96 = por %p94, %p95
      %p97 = scmp.ne.s32.totalorder %s86, %s89
      %p98 = scmp.eq.s32.totalorder %s13, 3
      %p99 = por %p97, %p98
      %p100 = scmp.ne.s32.totalorder %s89, %s90
      %p101 = scmp.eq.s32.totalorder %s13, 0
      %p102 = por %p100, %p101
      %p103 = scmp.ne.s32.totalorder %s89, %s90
      %p104 = scmp.eq.s32.totalorder %s14, 3
      %p105 = por %p103, %p104
      %p107 = scmp.ne.s32.totalorder %s90, %s106
      %p108 = scmp.eq.s32.totalorder %s14, 0
      %p109 = por %p107, %p108
      %p110 = scmp.le.s32.totalorder 1, %s8
      %p111 = scmp.lt.s32.totalorder %s8, 5
      %p112 = pnand %p110, %p111
      %p113 = pneg %p112
      // Predicated region
      $region9: #{_ffm_impl.3} parent=5 // pred_check
        _
      $region10: #{_ffm_impl.3} parent=5 // pred_check_branch
        %115 = sbr.rel (%p112) target = $region12
      $region11: #{_ffm_impl.3} parent=5 // pred_region
        %s116 = ssub.s32 %s8, 1
      $region12: #{_ffm_impl.3} parent=5 // pred_fallthru
        _
      %p117 = scmp.lt.s32.totalorder %s8, 4
      // Predicated region
      $region13: #{_ffm_impl.3} parent=5 // pred_check
        %p118 = pneg %p117
      $region14: #{_ffm_impl.3} parent=5 // pred_check_branch
        %120 = sbr.rel (%p118) target = $region16
      $region15: #{_ffm_impl.3} parent=5 // pred_region
        // Predicated region
        $region17: #{_ffm_impl.3} parent=15 // pred_check
          %p121 = pneg %p40
        $region18: #{_ffm_impl.3} parent=15 // pred_check_branch
          %123 = sbr.rel (%p121) target = $region20
        $region19: #{_ffm_impl.3} parent=15 // pred_region
          %p124 = scmp.lt.s32.totalorder %s15, 1
          %s125 = scalar_select %p124, %s15, 1
          %s126 = smul.addr %s125, 2
          %s127 = smul.addr %s126, 8
          %s128 = scalar_lea.vmem %s0, %s127
        $region20: #{_ffm_impl.3} parent=15 // pred_fallthru
          _
        // Predicated region
        $region21: #{_ffm_impl.3} parent=15 // pred_check
          %p129 = pneg %p68
        $region22: #{_ffm_impl.3} parent=15 // pred_check_branch
          %131 = sbr.rel (%p129) target = $region24
        $region23: #{_ffm_impl.3} parent=15 // pred_region
          %s132 = sand.u32 %s58, 1
          %s133 = sand.u32 %s58, 1
          %s134 = smul.addr %s133, 8
          %s135 = scalar_lea.vmem [#allocation2], %s134
          %s136 = smul.addr %s15, 4
          %s137 = sadd.s32 %s16, %s136
          %s138 = smul.addr %s137, 4
          %s139 = scalar_lea.vmem %s1, %s138
          // Predicated region
          $region25: #{_ffm_impl.3} parent=23 // pred_check
            _
          $region26: #{_ffm_impl.3} parent=23 // pred_check_branch
            %141 = sbr.rel (0) target = $region28
          $region27: #{_ffm_impl.3} parent=23 // pred_region
            // Predicated region
            $region29: #{_ffm_impl.3} parent=27 // pred_check
              _
            $region30: #{_ffm_impl.3} parent=27 // pred_check_branch
              %143 = sbr.rel target = $region32
            $region31: #{_ffm_impl.3} parent=27 // pred_region
              // Predicated region
              $region44: #{_ffm_impl.3} parent=31 // pred_check
                _
              $region45: #{_ffm_impl.3} parent=31 // pred_check_branch
                %161 = sbr.rel (0) target = $region47
              $region46: #{_ffm_impl.3} parent=31 // pred_region
                loop: start=0, step=1, limit=1
                $region48: #{_ffm_impl.3} parent=46 // loop_pre_header
                  _
                $region49: #{_ffm_impl.3} parent=46 // loop_header
                  %s163 = sphi 0, %s167
                  %p164 = scmp.ge.s32.totalorder %s163, 1
                  %s168 = sphi %s139, %s139
                  %s169 = sphi %s135, %s135
                $region50: #{_ffm_impl.3} parent=46 // loop_header_branch
                  %166 = sbr.rel (%p164) target = $region54
                $region51: #{_ffm_impl.3} parent=46 // loop_body
                  _
                $region52: #{_ffm_impl.3} parent=46 // loop_footer
                  %s167 = sadd.s32 1, %s163
                $region53: #{_ffm_impl.3} parent=46 // loop_footer_branch
                  %162 = sbr.rel target = $region49
                $region54: #{_ffm_impl.3} parent=46 // loop_exit
                  _
                %s171 = ssub.s32 16, 1
                loop: start=0, step=1, limit=1
                $region55: #{_ffm_impl.3} parent=46 // loop_pre_header
                  _
                $region56: #{_ffm_impl.3} parent=46 // loop_header
                  %s173 = sphi 0, %s177
                  %p174 = scmp.ge.s32.totalorder %s173, 1
                  %s178 = sphi %s139, %s139
                  %s179 = sphi %s135, %s135
                $region57: #{_ffm_impl.3} parent=46 // loop_header_branch
                  %176 = sbr.rel (%p174) target = $region61
                $region58: #{_ffm_impl.3} parent=46 // loop_body
                  %v180 = vld [vmem:[%s178] sm:%s171]
                  %181 = vst [vmem:[%s179] sm:%s171] %v180
                  %v182 = vld [vmem:[%s178 + $0x8] sm:%s171]
                  %183 = vst [vmem:[%s179 + $0x4] sm:%s171] %v182
                $region59: #{_ffm_impl.3} parent=46 // loop_footer
                  %s177 = sadd.s32 1, %s173
                $region60: #{_ffm_impl.3} parent=46 // loop_footer_branch
                  %172 = sbr.rel target = $region56
                $region61: #{_ffm_impl.3} parent=46 // loop_exit
                  _
              $region47: #{_ffm_impl.3} parent=31 // pred_fallthru
                _
            $region32: #{_ffm_impl.3} parent=27 // pred_fallthru
              _
            // Predicated region
            $region33: #{_ffm_impl.3} parent=27 // pred_check
              _
            $region34: #{_ffm_impl.3} parent=27 // pred_check_branch
              %145 = sbr.rel (0) target = $region36
            $region35: #{_ffm_impl.3} parent=27 // pred_region
              %s147 = ssub.s32 16, 1
              loop: start=0, step=1, limit=1
              $region37: #{_ffm_impl.3} parent=35 // loop_pre_header
                _
              $region38: #{_ffm_impl.3} parent=35 // loop_header
                %s149 = sphi 0, %s153
                %p150 = scmp.ge.s32.totalorder %s149, 1
                %s154 = sphi %s139, %s139
                %s155 = sphi %s135, %s135
              $region39: #{_ffm_impl.3} parent=35 // loop_header_branch
                %152 = sbr.rel (%p150) target = $region43
              $region40: #{_ffm_impl.3} parent=35 // loop_body
                %v156 = vld [vmem:[%s154] sm:%s147]
                %157 = vst [vmem:[%s155] sm:%s147] %v156
                %v158 = vld [vmem:[%s154 + $0x8] sm:%s147]
                %159 = vst [vmem:[%s155 + $0x4] sm:%s147] %v158
              $region41: #{_ffm_impl.3} parent=35 // loop_footer
                %s153 = sadd.s32 1, %s149
              $region42: #{_ffm_impl.3} parent=35 // loop_footer_branch
                %148 = sbr.rel target = $region38
              $region43: #{_ffm_impl.3} parent=35 // loop_exit
                _
            $region36: #{_ffm_impl.3} parent=27 // pred_fallthru
              _
          $region28: #{_ffm_impl.3} parent=23 // pred_fallthru
            _
          %184 = vnop
        $region24: #{_ffm_impl.3} parent=15 // pred_fallthru
          _
      $region16: #{_ffm_impl.3} parent=5 // pred_fallthru
        _
      %p185 = scmp.le.s32.totalorder 1, %s8
      %p186 = scmp.lt.s32.totalorder %s8, 5
      %p187 = pnand %p185, %p186
      %p188 = pneg %p187
      // Predicated region
      $region62: #{_ffm_impl.3} parent=5 // pred_check
        _
      $region63: #{_ffm_impl.3} parent=5 // pred_check_branch
        %190 = sbr.rel (%p187) target = $region65
      $region64: #{_ffm_impl.3} parent=5 // pred_region
        %s191 = ssub.s32 %s8, 1
        %s192 = sand.u32 %s61, 1
        %s193 = sand.u32 %s61, 1
        %s194 = smul.addr %s193, 8
        %s195 = scalar_lea.vmem [#allocation2], %s194
        // Predicated region
        $region66: #{_ffm_impl.3} parent=64 // pred_check
          %p196 = pneg %p74
        $region67: #{_ffm_impl.3} parent=64 // pred_check_branch
          %198 = sbr.rel (%p196) target = $region69
        $region68: #{_ffm_impl.3} parent=64 // pred_region
          _
        $region69: #{_ffm_impl.3} parent=64 // pred_fallthru
          _
        %p199 = scmp.lt.s32.totalorder %s17, 1
        %s200 = scalar_select %p199, %s17, 1
        %s201 = smul.addr %s200, 2
        %s202 = smul.addr %s201, 8
        %s203 = scalar_lea.vmem %s0, %s202
        %p204 = pneg %p46
        %p205 = pneg %p43
        %s206 = sand.u32 %s61, 1
        %s207 = sand.u32 %s61, 1
        %s208 = smul.addr %s207, 8
        %s209 = scalar_lea.vmem [#allocation2], %s208
        %p210 = pneg %p74
        %p211 = pneg %p71
        %p212 = pneg %p102
        %p213 = pneg %p99
        %s214 = sand.u32 %s89, 1
        %s215 = sand.u32 %s89, 1
        %s216 = smul.addr %s215, 8
        %s217 = scalar_lea.vmem [#allocation3], %s216
        %p218 = scmp.lt.s32.totalorder %s17, 1
        %s219 = scalar_select %p218, %s17, 1
        %s220 = smul.addr %s219, 2
        %s221 = smul.addr %s220, 8
        %s222 = scalar_lea.vmem %s0, %s221
        %v223 = vld [vmem:[%s195] sm:$0xf]
        %v224 = vld [vmem:[%s195 + $0x4] sm:$0xf]
        %v225 = vld [vmem:[%s222] sm:$0xff]
        %v226 = vld [vmem:[%s222 + $0x8] sm:$0xff]
        %v227 = vpack.c.bf16 %v226, %v225
        %229 = vset.pattern.permute.xlu0 0
        %230 = vperm.xlu0 %229, %v227
        %v231 = vpop.permute.xlu0 %230
        %v234 = vunpack.c.l.s4 839922192
        %v235 = vunpack.c.0.s8 %v234
        %v236 = vlaneseq
        %v237 = vshrl.u32 %v236, 7
        %v238 = vsub.s32 %v235, %v237
        %v239 = vrot.slane %v231, %v238
        %v241 = vunpack.c.l.s4 1985246804
        %v242 = vunpack.c.0.s8 %v241
        %v243 = vlaneseq
        %v244 = vshrl.u32 %v243, 7
        %v245 = vsub.s32 %v242, %v244
        %v246 = vrot.slane %v231, %v245
        %v249 = vmul.bf16 %v223, %v239
        %v250 = vmul.bf16 %v224, %v246
        %251 = vst [vmem:[%s217] sm:$0xf] %v249
        %252 = vst [vmem:[%s217 + $0x4] sm:$0xf] %v250
        %s253 = sand.u32 %s89, 1
        %s254 = sand.u32 %s89, 1
        %s255 = smul.addr %s254, 8
        %s256 = scalar_lea.vmem [#allocation3], %s255
        // Predicated region
        $region70: #{_ffm_impl.3} parent=64 // pred_check
          %p257 = pneg %p99
        $region71: #{_ffm_impl.3} parent=64 // pred_check_branch
          %259 = sbr.rel (%p257) target = $region73
        $region72: #{_ffm_impl.3} parent=64 // pred_region
          %s260 = smul.addr %s17, 4
          %s261 = sadd.s32 %s18, %s260
          %s262 = smul.addr %s261, 4
          %s263 = scalar_lea.vmem %s2, %s262
          // Predicated region
          $region74: #{_ffm_impl.3} parent=72 // pred_check
            _
          $region75: #{_ffm_impl.3} parent=72 // pred_check_branch
            %265 = sbr.rel (0) target = $region77
          $region76: #{_ffm_impl.3} parent=72 // pred_region
            // Predicated region
            $region78: #{_ffm_impl.3} parent=76 // pred_check
              _
            $region79: #{_ffm_impl.3} parent=76 // pred_check_branch
              %267 = sbr.rel target = $region81
            $region80: #{_ffm_impl.3} parent=76 // pred_region
              // Predicated region
              $region93: #{_ffm_impl.3} parent=80 // pred_check
                _
              $region94: #{_ffm_impl.3} parent=80 // pred_check_branch
                %285 = sbr.rel (0) target = $region96
              $region95: #{_ffm_impl.3} parent=80 // pred_region
                loop: start=0, step=1, limit=1
                $region97: #{_ffm_impl.3} parent=95 // loop_pre_header
                  _
                $region98: #{_ffm_impl.3} parent=95 // loop_header
                  %s287 = sphi 0, %s291
                  %p288 = scmp.ge.s32.totalorder %s287, 1
                  %s292 = sphi %s256, %s256
                  %s293 = sphi %s263, %s263
                $region99: #{_ffm_impl.3} parent=95 // loop_header_branch
                  %290 = sbr.rel (%p288) target = $region103
                $region100: #{_ffm_impl.3} parent=95 // loop_body
                  _
                $region101: #{_ffm_impl.3} parent=95 // loop_footer
                  %s291 = sadd.s32 1, %s287
                $region102: #{_ffm_impl.3} parent=95 // loop_footer_branch
                  %286 = sbr.rel target = $region98
                $region103: #{_ffm_impl.3} parent=95 // loop_exit
                  _
                %s295 = ssub.s32 16, 1
                loop: start=0, step=1, limit=1
                $region104: #{_ffm_impl.3} parent=95 // loop_pre_header
                  _
                $region105: #{_ffm_impl.3} parent=95 // loop_header
                  %s297 = sphi 0, %s301
                  %p298 = scmp.ge.s32.totalorder %s297, 1
                  %s302 = sphi %s256, %s256
                  %s303 = sphi %s263, %s263
                $region106: #{_ffm_impl.3} parent=95 // loop_header_branch
                  %300 = sbr.rel (%p298) target = $region110
                $region107: #{_ffm_impl.3} parent=95 // loop_body
                  %v304 = vld [vmem:[%s302] sm:%s295]
                  %305 = vst [vmem:[%s303] sm:%s295] %v304
                  %v306 = vld [vmem:[%s302 + $0x4] sm:%s295]
                  %307 = vst [vmem:[%s303 + $0x8] sm:%s295] %v306
                $region108: #{_ffm_impl.3} parent=95 // loop_footer
                  %s301 = sadd.s32 1, %s297
                $region109: #{_ffm_impl.3} parent=95 // loop_footer_branch
                  %296 = sbr.rel target = $region105
                $region110: #{_ffm_impl.3} parent=95 // loop_exit
                  _
              $region96: #{_ffm_impl.3} parent=80 // pred_fallthru
                _
            $region81: #{_ffm_impl.3} parent=76 // pred_fallthru
              _
            // Predicated region
            $region82: #{_ffm_impl.3} parent=76 // pred_check
              _
            $region83: #{_ffm_impl.3} parent=76 // pred_check_branch
              %269 = sbr.rel (0) target = $region85
            $region84: #{_ffm_impl.3} parent=76 // pred_region
              %s271 = ssub.s32 16, 1
              loop: start=0, step=1, limit=1
              $region86: #{_ffm_impl.3} parent=84 // loop_pre_header
                _
              $region87: #{_ffm_impl.3} parent=84 // loop_header
                %s273 = sphi 0, %s277
                %p274 = scmp.ge.s32.totalorder %s273, 1
                %s278 = sphi %s256, %s256
                %s279 = sphi %s263, %s263
              $region88: #{_ffm_impl.3} parent=84 // loop_header_branch
                %276 = sbr.rel (%p274) target = $region92
              $region89: #{_ffm_impl.3} parent=84 // loop_body
                %v280 = vld [vmem:[%s278] sm:%s271]
                %281 = vst [vmem:[%s279] sm:%s271] %v280
                %v282 = vld [vmem:[%s278 + $0x4] sm:%s271]
                %283 = vst [vmem:[%s279 + $0x8] sm:%s271] %v282
              $region90: #{_ffm_impl.3} parent=84 // loop_footer
                %s277 = sadd.s32 1, %s273
              $region91: #{_ffm_impl.3} parent=84 // loop_footer_branch
                %272 = sbr.rel target = $region87
              $region92: #{_ffm_impl.3} parent=84 // loop_exit
                _
            $region85: #{_ffm_impl.3} parent=76 // pred_fallthru
              _
          $region77: #{_ffm_impl.3} parent=72 // pred_fallthru
            _
          %308 = vnop
        $region73: #{_ffm_impl.3} parent=64 // pred_fallthru
          _
      $region65: #{_ffm_impl.3} parent=5 // pred_fallthru
        _
      %p309 = scmp.le.s32.totalorder 2, %s8
      // Predicated region
      $region111: #{_ffm_impl.3} parent=5 // pred_check
        %p310 = pneg %p309
      $region112: #{_ffm_impl.3} parent=5 // pred_check_branch
        %312 = sbr.rel (%p310) target = $region114
      $region113: #{_ffm_impl.3} parent=5 // pred_region
        %s313 = ssub.s32 %s8, 2
        // Predicated region
        $region115: #{_ffm_impl.3} parent=113 // pred_check
          %p314 = pneg %p105
        $region116: #{_ffm_impl.3} parent=113 // pred_check_branch
          %316 = sbr.rel (%p314) target = $region118
        $region117: #{_ffm_impl.3} parent=113 // pred_region
          %s317 = sand.u32 %s90, 1
          %s318 = sand.u32 %s90, 1
          %s319 = smul.addr %s318, 8
          %s320 = scalar_lea.vmem [#allocation3], %s319
        $region118: #{_ffm_impl.3} parent=113 // pred_fallthru
          _
      $region114: #{_ffm_impl.3} parent=5 // pred_fallthru
        _
    $region6: #{_ffm_impl.3} parent=1 // loop_footer
      %s12 = sadd.s32 1, %s8
    $region7: #{_ffm_impl.3} parent=1 // loop_footer_branch
      %7 = sbr.rel target = $region3
    $region8: #{_ffm_impl.3} parent=1 // loop_exit
      _

// kernel: _ffm_impl.2
$region0: #{_ffm_impl.2}
  #allocation0 [shape = 'u32[]', space=smem, size = 0x4, offset = 0x4, fixed_abs, tag = 'smem constant byte address 0x4 - core index']
  #allocation1 [shape = 'u32[144,128]{1,0:T(1,128)}', space=vmem, size = 0x12000, scoped, tag = 'internal scratch']
  %s0 = inlined_call_operand.vmem [shape: f32[2,8,256], index: 0, kind: input, shape index: {}]
  %s1 = inlined_call_operand.vmem [shape: bf16[16,8], index: 1, kind: input, shape index: {}]
  %s2 = inlined_call_operand.vmem [shape: f32[16,1], index: 2, kind: input, shape index: {}]
  %s3 = inlined_call_operand.vmem [shape: bf16[2,16,256], index: 3, kind: output, shape index: {0}]
  %s4 = inlined_call_operand.vmem [shape: f32[2,16,1], index: 4, kind: output, shape index: {1}]
  %5 = xla_tuple %s3, %s4
  %s6 = sld [smem:[#allocation0]]
  $region94: #{_ffm_impl.2} parent=0
    _
  %s8 = ssub.s32 1, %s6
  %s9 = scalar_select 0, %s8, %s6
  $region1: #{_ffm_impl.2} parent=0
    #allocation2 [shape = 'u8[8192]{0}', space=vmem, size = 0x2000, scoped, tag = 'output window, operand 0']
    loop: start=0, step=1, limit=6
    $region2: #{_ffm_impl.2} parent=1 // loop_pre_header
      _
    $region3: #{_ffm_impl.2} parent=1 // loop_header
      %s11 = sphi 0, %s15
      %p12 = scmp.ge.s32.totalorder %s11, 6
      %s18 = sphi 0, %s30
      %s19 = sphi 0, %s26
      %s20 = sphi 0, %s18
      %s21 = sphi 0, %s19
      %s22 = sphi 0, %s20
      %s23 = sphi 0, %s21
      %s35 = sphi 0, %s37
      %s38 = sphi 0, %s35
      %s39 = sphi 0, %s38
      %s55 = sphi 0, %s39
      %s59 = sphi 0, %s59
      %s61 = sphi 0, %s59
      %s62 = sphi 0, %s61
      %s76 = sphi 0, %s62
      %s80 = sphi 0, %s80
      %s82 = sphi 0, %s80
      %s83 = sphi 0, %s82
      %s97 = sphi 0, %s83
      %s105 = sphi 0, %s107
      %s108 = sphi 0, %s105
      %s109 = sphi 0, %s108
      %s125 = sphi 0, %s109
      %s131 = sphi 0, %s133
      %s134 = sphi 0, %s131
      %s135 = sphi 0, %s134
      %s151 = sphi 0, %s135
    $region4: #{_ffm_impl.2} parent=1 // loop_header_branch
      %14 = sbr.rel (%p12) target = $region8
    $region5: #{_ffm_impl.2} parent=1 // loop_body
      %s16 = ssub.s32 %s11, 1
      %s17 = ssub.s32 %s11, 2
      %s24 = sadd.s32 1, %s19
      %p25 = scmp.ge.s32.totalorder %s24, 2
      %s26 = scalar_select %p25, 0, %s24
      %s27 = sadd.s32 1, %s18
      %s28 = scalar_select %p25, %s27, %s18
      %p29 = scmp.ge.s32.totalorder %s28, 2
      %s30 = scalar_select %p29, 0, %s28
      %s31 = ssub.s32 %s18, %s30
      %s32 = ssub.s32 %s19, %s26
      %s33 = sor.u32 %s31, %s32
      %p34 = scmp.eq.s32.totalorder %s33, 0
      %s36 = sadd.s32 %s35, 1
      %s37 = scalar_select %p34, %s35, %s36
      %p40 = pneg %p34
      %p41 = scmp.eq.s32.totalorder %s11, 3
      %p42 = por %p40, %p41
      %p43 = scmp.ne.s32.totalorder %s35, %s38
      %p44 = scmp.eq.s32.totalorder %s11, 0
      %p45 = por %p43, %p44
      %p46 = scmp.ne.s32.totalorder %s35, %s38
      %p47 = scmp.eq.s32.totalorder %s16, 3
      %p48 = por %p46, %p47
      %p49 = scmp.ne.s32.totalorder %s38, %s39
      %p50 = scmp.eq.s32.totalorder %s16, 0
      %p51 = por %p49, %p50
      %p52 = scmp.ne.s32.totalorder %s38, %s39
      %p53 = scmp.eq.s32.totalorder %s17, 3
      %p54 = por %p52, %p53
      %p56 = scmp.ne.s32.totalorder %s39, %s55
      %p57 = scmp.eq.s32.totalorder %s17, 0
      %p58 = por %p56, %p57
      %s60 = sadd.s32 %s59, 1
      %p63 = scmp.eq.s32.totalorder %s11, 3
      %p64 = scmp.ne.s32.totalorder %s59, %s61
      %p65 = scmp.eq.s32.totalorder %s11, 0
      %p66 = por %p64, %p65
      %p67 = scmp.ne.s32.totalorder %s59, %s61
      %p68 = scmp.eq.s32.totalorder %s16, 3
      %p69 = por %p67, %p68
      %p70 = scmp.ne.s32.totalorder %s61, %s62
      %p71 = scmp.eq.s32.totalorder %s16, 0
      %p72 = por %p70, %p71
      %p73 = scmp.ne.s32.totalorder %s61, %s62
      %p74 = scmp.eq.s32.totalorder %s17, 3
      %p75 = por %p73, %p74
      %p77 = scmp.ne.s32.totalorder %s62, %s76
      %p78 = scmp.eq.s32.totalorder %s17, 0
      %p79 = por %p77, %p78
      %s81 = sadd.s32 %s80, 1
      %p84 = scmp.eq.s32.totalorder %s11, 3
      %p85 = scmp.ne.s32.totalorder %s80, %s82
      %p86 = scmp.eq.s32.totalorder %s11, 0
      %p87 = por %p85, %p86
      %p88 = scmp.ne.s32.totalorder %s80, %s82
      %p89 = scmp.eq.s32.totalorder %s16, 3
      %p90 = por %p88, %p89
      %p91 = scmp.ne.s32.totalorder %s82, %s83
      %p92 = scmp.eq.s32.totalorder %s16, 0
      %p93 = por %p91, %p92
      %p94 = scmp.ne.s32.totalorder %s82, %s83
      %p95 = scmp.eq.s32.totalorder %s17, 3
      %p96 = por %p94, %p95
      %p98 = scmp.ne.s32.totalorder %s83, %s97
      %p99 = scmp.eq.s32.totalorder %s17, 0
      %p100 = por %p98, %p99
      %s101 = ssub.s32 %s18, %s30
      %s102 = ssub.s32 %s19, %s26
      %s103 = sor.u32 %s101, %s102
      %p104 = scmp.eq.s32.totalorder %s103, 0
      %s106 = sadd.s32 %s105, 1
      %s107 = scalar_select %p104, %s105, %s106
      %p110 = pneg %p104
      %p111 = scmp.eq.s32.totalorder %s11, 3
      %p112 = por %p110, %p111
      %p113 = scmp.ne.s32.totalorder %s105, %s108
      %p114 = scmp.eq.s32.totalorder %s11, 0
      %p115 = por %p113, %p114
      %p116 = scmp.ne.s32.totalorder %s105, %s108
      %p117 = scmp.eq.s32.totalorder %s16, 3
      %p118 = por %p116, %p117
      %p119 = scmp.ne.s32.totalorder %s108, %s109
      %p120 = scmp.eq.s32.totalorder %s16, 0
      %p121 = por %p119, %p120
      %p122 = scmp.ne.s32.totalorder %s108, %s109
      %p123 = scmp.eq.s32.totalorder %s17, 3
      %p124 = por %p122, %p123
      %p126 = scmp.ne.s32.totalorder %s109, %s125
      %p127 = scmp.eq.s32.totalorder %s17, 0
      %p128 = por %p126, %p127
      %s129 = ssub.s32 %s18, %s30
      %p130 = scmp.eq.s32.totalorder %s129, 0
      %s132 = sadd.s32 %s131, 1
      %s133 = scalar_select %p130, %s131, %s132
      %p136 = pneg %p130
      %p137 = scmp.eq.s32.totalorder %s11, 3
      %p138 = por %p136, %p137
      %p139 = scmp.ne.s32.totalorder %s131, %s134
      %p140 = scmp.eq.s32.totalorder %s11, 0
      %p141 = por %p139, %p140
      %p142 = scmp.ne.s32.totalorder %s131, %s134
      %p143 = scmp.eq.s32.totalorder %s16, 3
      %p144 = por %p142, %p143
      %p145 = scmp.ne.s32.totalorder %s134, %s135
      %p146 = scmp.eq.s32.totalorder %s16, 0
      %p147 = por %p145, %p146
      %p148 = scmp.ne.s32.totalorder %s134, %s135
      %p149 = scmp.eq.s32.totalorder %s17, 3
      %p150 = por %p148, %p149
      %p152 = scmp.ne.s32.totalorder %s135, %s151
      %p153 = scmp.eq.s32.totalorder %s17, 0
      %p154 = por %p152, %p153
      %p155 = scmp.le.s32.totalorder 1, %s11
      %p156 = scmp.lt.s32.totalorder %s11, 5
      %p157 = pnand %p155, %p156
      %p158 = pneg %p157
      // Predicated region
      $region9: #{_ffm_impl.2} parent=5 // pred_check
        _
      $region10: #{_ffm_impl.2} parent=5 // pred_check_branch
        %160 = sbr.rel (%p157) target = $region12
      $region11: #{_ffm_impl.2} parent=5 // pred_region
        %s161 = ssub.s32 %s11, 1
        // Predicated region
        $region13: #{_ffm_impl.2} parent=11 // pred_check
          %p162 = pneg %p72
        $region14: #{_ffm_impl.2} parent=11 // pred_check_branch
          %164 = sbr.rel (%p162) target = $region16
        $region15: #{_ffm_impl.2} parent=11 // pred_region
          _
        $region16: #{_ffm_impl.2} parent=11 // pred_fallthru
          _
        // Predicated region
        $region17: #{_ffm_impl.2} parent=11 // pred_check
          %p165 = pneg %p93
        $region18: #{_ffm_impl.2} parent=11 // pred_check_branch
          %167 = sbr.rel (%p165) target = $region20
        $region19: #{_ffm_impl.2} parent=11 // pred_region
          _
        $region20: #{_ffm_impl.2} parent=11 // pred_fallthru
          _
      $region12: #{_ffm_impl.2} parent=5 // pred_fallthru
        _
      %p168 = scmp.lt.s32.totalorder %s11, 4
      // Predicated region
      $region21: #{_ffm_impl.2} parent=5 // pred_check
        %p169 = pneg %p168
      $region22: #{_ffm_impl.2} parent=5 // pred_check_branch
        %171 = sbr.rel (%p169) target = $region24
      $region23: #{_ffm_impl.2} parent=5 // pred_region
        // Predicated region
        $region25: #{_ffm_impl.2} parent=23 // pred_check
          %p172 = pneg %p45
        $region26: #{_ffm_impl.2} parent=23 // pred_check_branch
          %174 = sbr.rel (%p172) target = $region28
        $region27: #{_ffm_impl.2} parent=23 // pred_region
          %p175 = scmp.lt.s32.totalorder %s18, 1
          %s176 = scalar_select %p175, %s18, 1
          %p177 = scmp.lt.s32.totalorder %s19, 1
          %s178 = scalar_select %p177, %s19, 1
          %s179 = smul.addr %s176, 2
          %s180 = sadd.s32 %s178, %s179
          %s181 = smul.addr %s180, 8
          %s182 = scalar_lea.vmem %s0, %s181
        $region28: #{_ffm_impl.2} parent=23 // pred_fallthru
          _
      $region24: #{_ffm_impl.2} parent=5 // pred_fallthru
        _
      %p183 = scmp.le.s32.totalorder 1, %s11
      %p184 = scmp.lt.s32.totalorder %s11, 5
      %p185 = pnand %p183, %p184
      %p186 = pneg %p185
      // Predicated region
      $region29: #{_ffm_impl.2} parent=5 // pred_check
        _
      $region30: #{_ffm_impl.2} parent=5 // pred_check_branch
        %188 = sbr.rel (%p185) target = $region32
      $region31: #{_ffm_impl.2} parent=5 // pred_region
        %s189 = ssub.s32 %s11, 1
        %p190 = scmp.lt.s32.totalorder %s20, 1
        %s191 = scalar_select %p190, %s20, 1
        %p192 = scmp.lt.s32.totalorder %s21, 1
        %s193 = scalar_select %p192, %s21, 1
        %s194 = smul.addr %s191, 2
        %s195 = sadd.s32 %s193, %s194
        %s196 = smul.addr %s195, 8
        %s197 = scalar_lea.vmem %s0, %s196
        %p198 = pneg %p51
        %p199 = pneg %p48
        %p200 = pneg %p72
        %p201 = pneg %p69
        %p202 = pneg %p93
        %p203 = pneg %p90
        %p204 = pneg %p121
        %p205 = pneg %p118
        %s206 = sand.u32 %s108, 1
        %s207 = sand.u32 %s108, 1
        %s208 = smul.addr %s207, 8
        %s209 = scalar_lea.vmem [#allocation2], %s208
        %p210 = pneg %p147
        %p211 = pneg %p144
        %p212 = scmp.lt.s32.totalorder %s20, 1
        %s213 = scalar_select %p212, %s20, 1
        %s214 = smul.addr %s213, 2
        %s215 = smul.addr %s214, 8
        %s216 = scalar_lea.vmem %s4, %s215
        %p217 = scmp.lt.s32.totalorder %s20, 1
        %s218 = scalar_select %p217, %s20, 1
        %p219 = scmp.lt.s32.totalorder %s21, 1
        %s220 = scalar_select %p219, %s21, 1
        %s221 = smul.addr %s218, 2
        %s222 = sadd.s32 %s220, %s221
        %s223 = smul.addr %s222, 8
        %s224 = scalar_lea.vmem %s0, %s223
        %p225 = scmp.lt.s32.totalorder %s20, 1
        %s226 = scalar_select %p225, %s20, 1
        %s227 = smul.addr %s226, 2
        %s228 = smul.addr %s227, 8
        %s229 = scalar_lea.vmem %s4, %s228
        %v231 = vld [vmem:[%s224] sm:$0xff]
        %v232 = vpack.c.bf16 %v231, %v231
        %v233 = vld [vmem:[%s1] sm:$0xf]
        %v234 = vld [vmem:[%s1 + $0x4] sm:$0xf]
        %v235 = vld [vmem:[%s2] sm:$0xff]
        %v236 = vld [vmem:[%s2 + $0x8] sm:$0xff]
        %238 = vset.pattern.permute.xlu0 0
        %239 = vperm.xlu0 %238, %v235
        %v240 = vpop.permute.xlu0 %239
        %243 = vset.pattern.permute.xlu0 0
        %244 = vperm.xlu0 %243, %v236
        %v245 = vpop.permute.xlu0 %244
        %v249 = vunpack.c.l.b16 %v233
        %v250 = vunpack.c.l.b16 %v234
        %v251 = vpack.c.b16 %v250, %v249
        %vm252 = vcmask 64512
        %v254 = vsel %vm252, %v251, 0
        %vm256 = vcmask 1043456
        %v258 = vsel %vm256, %v232, 0
        %260 = vmatprep.subr.bf16.mxu0 0
        %261 = vmatpush1.bf16.msra.mxu0 0
        %262 = vmatprep.subr.bf16.mxu0 0
        %263 = vmatpush1.bf16.msra.mxu0 0
        %264 = vmatprep.subr.bf16.mxu0 0
        %265 = vmatpush1.bf16.msra.mxu0 0
        %266 = vmatprep.subr.bf16.mxu0 0
        %267 = vmatpush1.bf16.msra.mxu0 0
        %268 = vmatprep.subr.bf16.mxu0 0
        %269 = vmatpush1.bf16.msra.mxu0 0
        %270 = vmatprep.subr.bf16.mxu0 0
        %271 = vmatpush1.bf16.msra.mxu0 0
        %272 = vmatprep.subr.bf16.mxu0 0
        %273 = vmatpush1.bf16.msra.mxu0 0
        %274 = vmatprep.subr.bf16.mxu0 0
        %275 = vmatpush1.bf16.msra.mxu0 %v258
        %276 = vmatprep.subr.bf16.mxu0 0
        %277 = vmatpush2.bf16.msra.mxu0 0
        %278 = vmatprep.subr.bf16.mxu0 0
        %279 = vmatpush2.bf16.msra.mxu0 0
        %280 = vmatprep.subr.bf16.mxu0 0
        %281 = vmatpush2.bf16.msra.mxu0 0
        %282 = vmatprep.subr.bf16.mxu0 0
        %283 = vmatpush2.bf16.msra.mxu0 0
        %284 = vmatprep.subr.bf16.mxu0 0
        %285 = vmatpush2.bf16.msra.mxu0 0
        %286 = vmatprep.subr.bf16.mxu0 0
        %287 = vmatpush2.bf16.msra.mxu0 0
        %288 = vmatprep.subr.bf16.mxu0 0
        %289 = vmatpush2.bf16.msra.mxu0 0
        %290 = vmatprep.subr.bf16.mxu0 0
        %291 = vmatpush2.bf16.msra.mxu0 0
        %292 = vmatprep.mubr.bf16.mxu0 0
        %293 = vmatmul.mubr.bf16.gmra.mxu0 %v254
        %v294 = vpop.f32.mrf.mxu0
        %v295 = vadd.f32 %v240, %v294
        %v296 = vpop.f32.mrf.mxu0
        %v297 = vpop.f32.mrf.mxu0
        %v298 = vadd.f32 %v245, %v297
        %v299 = vpop.f32.mrf.mxu0
        %300 = vdwg.mxu0
        %v301 = vmax.f32 %v295, 0.0
        %v302 = vmax.f32 %v298, 0.0
        %v303 = vpack.c.bf16 %v302, %v301
        %v305 = vunpack.c.l.b16 %v303
        %v306 = vunpack.c.h.b16 %v303
        %v307 = vpack.c.b16 %v305, %v305
        %v308 = vpack.c.b16 %v306, %v306
        %311 = vst [vmem:[%s209] sm:$0xf] %v307
        %312 = vst [vmem:[%s209 + $0x4] sm:$0xf] %v308
        %p313 = scmp.eq.s32.totalorder %s21, 0
        // Predicated region
        $region33: #{_ffm_impl.2} parent=31 // pred_check
          %p314 = pneg %p313
        $region34: #{_ffm_impl.2} parent=31 // pred_check_branch
          %316 = sbr.rel (%p314) target = $region36
        $region35: #{_ffm_impl.2} parent=31 // pred_region
          %vm317 = vcmask 7168
          %318 = vst.msk [vmem:[%s229] sm:$0xff] %vm317, 0.0
          %319 = vst.msk [vmem:[%s229 + $0x8] sm:$0xff] %vm317, 0.0
        $region36: #{_ffm_impl.2} parent=31 // pred_fallthru
          _
        %v320 = vld [vmem:[%s229] sm:$0xff]
        %v321 = vld [vmem:[%s229 + $0x8] sm:$0xff]
        %322 = vadd.xlane.f32.xlu0 %v301
        %v323 = vpop.xlane.xlu0 %322
        %324 = vadd.xlane.f32.xlu0 %v302
        %v325 = vpop.xlane.xlu0 %324
        %v326 = vadd.f32 %v320, %v323
        %v327 = vadd.f32 %v321, %v325
        %vm328 = vcmask 7168
        %329 = vst.msk [vmem:[%s229] sm:$0xff] %vm328, %v326
        %330 = vst.msk [vmem:[%s229 + $0x8] sm:$0xff] %vm328, %v327
        %s331 = sand.u32 %s108, 1
        %s332 = sand.u32 %s108, 1
        %s333 = smul.addr %s332, 8
        %s334 = scalar_lea.vmem [#allocation2], %s333
        %p335 = scmp.lt.s32.totalorder %s20, 1
        %s336 = scalar_select %p335, %s20, 1
        %s337 = smul.addr %s336, 2
        %s338 = smul.addr %s337, 8
        %s339 = scalar_lea.vmem %s4, %s338
        // Predicated region
        $region37: #{_ffm_impl.2} parent=31 // pred_check
          %p340 = pneg %p118
        $region38: #{_ffm_impl.2} parent=31 // pred_check_branch
          %342 = sbr.rel (%p340) target = $region40
        $region39: #{_ffm_impl.2} parent=31 // pred_region
          %s343 = smul.addr %s20, 4
          %s344 = sadd.s32 %s21, %s343
          %s345 = smul.addr %s344, 4
          %s346 = scalar_lea.vmem %s3, %s345
          // Predicated region
          $region41: #{_ffm_impl.2} parent=39 // pred_check
            _
          $region42: #{_ffm_impl.2} parent=39 // pred_check_branch
            %348 = sbr.rel (0) target = $region44
          $region43: #{_ffm_impl.2} parent=39 // pred_region
            // Predicated region
            $region45: #{_ffm_impl.2} parent=43 // pred_check
              _
            $region46: #{_ffm_impl.2} parent=43 // pred_check_branch
              %350 = sbr.rel target = $region48
            $region47: #{_ffm_impl.2} parent=43 // pred_region
              // Predicated region
              $region60: #{_ffm_impl.2} parent=47 // pred_check
                _
              $region61: #{_ffm_impl.2} parent=47 // pred_check_branch
                %368 = sbr.rel (0) target = $region63
              $region62: #{_ffm_impl.2} parent=47 // pred_region
                loop: start=0, step=1, limit=1
                $region64: #{_ffm_impl.2} parent=62 // loop_pre_header
                  _
                $region65: #{_ffm_impl.2} parent=62 // loop_header
                  %s370 = sphi 0, %s374
                  %p371 = scmp.ge.s32.totalorder %s370, 1
                  %s375 = sphi %s334, %s334
                  %s376 = sphi %s346, %s346
                $region66: #{_ffm_impl.2} parent=62 // loop_header_branch
                  %373 = sbr.rel (%p371) target = $region70
                $region67: #{_ffm_impl.2} parent=62 // loop_body
                  _
                $region68: #{_ffm_impl.2} parent=62 // loop_footer
                  %s374 = sadd.s32 1, %s370
                $region69: #{_ffm_impl.2} parent=62 // loop_footer_branch
                  %369 = sbr.rel target = $region65
                $region70: #{_ffm_impl.2} parent=62 // loop_exit
                  _
                %s378 = ssub.s32 16, 1
                loop: start=0, step=1, limit=1
                $region71: #{_ffm_impl.2} parent=62 // loop_pre_header
                  _
                $region72: #{_ffm_impl.2} parent=62 // loop_header
                  %s380 = sphi 0, %s384
                  %p381 = scmp.ge.s32.totalorder %s380, 1
                  %s385 = sphi %s334, %s334
                  %s386 = sphi %s346, %s346
                $region73: #{_ffm_impl.2} parent=62 // loop_header_branch
                  %383 = sbr.rel (%p381) target = $region77
                $region74: #{_ffm_impl.2} parent=62 // loop_body
                  %v387 = vld [vmem:[%s385] sm:%s378]
                  %388 = vst [vmem:[%s386] sm:%s378] %v387
                  %v389 = vld [vmem:[%s385 + $0x4] sm:%s378]
                  %390 = vst [vmem:[%s386 + $0x8] sm:%s378] %v389
                $region75: #{_ffm_impl.2} parent=62 // loop_footer
                  %s384 = sadd.s32 1, %s380
                $region76: #{_ffm_impl.2} parent=62 // loop_footer_branch
                  %379 = sbr.rel target = $region72
                $region77: #{_ffm_impl.2} parent=62 // loop_exit
                  _
              $region63: #{_ffm_impl.2} parent=47 // pred_fallthru
                _
            $region48: #{_ffm_impl.2} parent=43 // pred_fallthru
              _
            // Predicated region
            $region49: #{_ffm_impl.2} parent=43 // pred_check
              _
            $region50: #{_ffm_impl.2} parent=43 // pred_check_branch
              %352 = sbr.rel (0) target = $region52
            $region51: #{_ffm_impl.2} parent=43 // pred_region
              %s354 = ssub.s32 16, 1
              loop: start=0, step=1, limit=1
              $region53: #{_ffm_impl.2} parent=51 // loop_pre_header
                _
              $region54: #{_ffm_impl.2} parent=51 // loop_header
                %s356 = sphi 0, %s360
                %p357 = scmp.ge.s32.totalorder %s356, 1
                %s361 = sphi %s334, %s334
                %s362 = sphi %s346, %s346
              $region55: #{_ffm_impl.2} parent=51 // loop_header_branch
                %359 = sbr.rel (%p357) target = $region59
              $region56: #{_ffm_impl.2} parent=51 // loop_body
                %v363 = vld [vmem:[%s361] sm:%s354]
                %364 = vst [vmem:[%s362] sm:%s354] %v363
                %v365 = vld [vmem:[%s361 + $0x4] sm:%s354]
                %366 = vst [vmem:[%s362 + $0x8] sm:%s354] %v365
              $region57: #{_ffm_impl.2} parent=51 // loop_footer
                %s360 = sadd.s32 1, %s356
              $region58: #{_ffm_impl.2} parent=51 // loop_footer_branch
                %355 = sbr.rel target = $region54
              $region59: #{_ffm_impl.2} parent=51 // loop_exit
                _
            $region52: #{_ffm_impl.2} parent=43 // pred_fallthru
              _
          $region44: #{_ffm_impl.2} parent=39 // pred_fallthru
            _
          %391 = vnop
        $region40: #{_ffm_impl.2} parent=31 // pred_fallthru
          _
        // Predicated region
        $region78: #{_ffm_impl.2} parent=31 // pred_check
          %p392 = pneg %p144
        $region79: #{_ffm_impl.2} parent=31 // pred_check_branch
          %394 = sbr.rel (%p392) target = $region81
        $region80: #{_ffm_impl.2} parent=31 // pred_region
          _
        $region81: #{_ffm_impl.2} parent=31 // pred_fallthru
          _
      $region32: #{_ffm_impl.2} parent=5 // pred_fallthru
        _
      %p395 = scmp.le.s32.totalorder 2, %s11
      // Predicated region
      $region82: #{_ffm_impl.2} parent=5 // pred_check
        %p396 = pneg %p395
      $region83: #{_ffm_impl.2} parent=5 // pred_check_branch
        %398 = sbr.rel (%p396) target = $region85
      $region84: #{_ffm_impl.2} parent=5 // pred_region
        %s399 = ssub.s32 %s11, 2
        // Predicated region
        $region86: #{_ffm_impl.2} parent=84 // pred_check
          %p400 = pneg %p124
        $region87: #{_ffm_impl.2} parent=84 // pred_check_branch
          %402 = sbr.rel (%p400) target = $region89
        $region88: #{_ffm_impl.2} parent=84 // pred_region
          %s403 = sand.u32 %s109, 1
          %s404 = sand.u32 %s109, 1
          %s405 = smul.addr %s404, 8
          %s406 = scalar_lea.vmem [#allocation2], %s405
        $region89: #{_ffm_impl.2} parent=84 // pred_fallthru
          _
        // Predicated region
        $region90: #{_ffm_impl.2} parent=84 // pred_check
          %p407 = pneg %p150
        $region91: #{_ffm_impl.2} parent=84 // pred_check_branch
          %409 = sbr.rel (%p407) target = $region93
        $region92: #{_ffm_impl.2} parent=84 // pred_region
          %p410 = scmp.lt.s32.totalorder %s22, 1
          %s411 = scalar_select %p410, %s22, 1
          %s412 = smul.addr %s411, 2
          %s413 = smul.addr %s412, 8
          %s414 = scalar_lea.vmem %s4, %s413
        $region93: #{_ffm_impl.2} parent=84 // pred_fallthru
          _
      $region85: #{_ffm_impl.2} parent=5 // pred_fallthru
        _
    $region6: #{_ffm_impl.2} parent=1 // loop_footer
      %s15 = sadd.s32 1, %s11
    $region7: #{_ffm_impl.2} parent=1 // loop_footer_branch
      %10 = sbr.rel target = $region3
    $region8: #{_ffm_impl.2} parent=1 // loop_exit
      _

</llo_original>
